<compile_context>
chip_gen: v7x
topology: tpu7x:2x2x1
jax: 0.10.0
libtpu: 0.0.40
codegen_flags: <defaults>
</compile_context>

<pallas_src>
import functools

import jax
import jax.numpy as jnp
from jax.experimental import pallas as pl
from jax.experimental.pallas import tpu as pltpu

LOG_STD_MIN = -20.0
LOG_STD_MAX = 2.0

LANES = 128              # padded width for hidden layers / fused head
TILE_B_MAX = 2048        # max batch rows per grid step
SINGLE_STEP_BATCH = 256  # <= this: one unpadded grid step (inference path)


def _round_up(x, m):
    return (x + m - 1) // m * m


def _cdiv(a, b):
    return -(-a // b)


def policy_kernel(x_ref, w1_ref, wr_ref, b_ref, out_ref):
    """One batch tile of the SAC policy MLP.

    x_ref   : (TILE_B, num_inputs) bf16  raw (unpadded) state features
    w1_ref  : (num_inputs, P)      bf16  layer-1 weight, VMEM-resident
    wr_ref  : (4*P, P)             bf16  [w2; w3; w4; [wm|ws]] padded, resident
    b_ref   : (8, P) f32  rows 0..3=b1..b4, row 4=[bm|bs], row 5 unused,
                          row 6=lo clamp bounds, row 7=hi clamp bounds
    out_ref : (TILE_B, 2*A) f32    [mean | log_std], lane-narrow writeback
    """
    p = wr_ref.shape[1]

    # Layer 1: contract over the raw feature dim (K=43); Mosaic masks the
    # non-128 contraction internally, so no host-side column padding needed.
    h = jnp.dot(x_ref[...], w1_ref[...], preferred_element_type=jnp.float32)
    h = jnp.maximum(h + b_ref[0:1, :], 0.0).astype(jnp.bfloat16)

    # Layers 2..4: bf16 matmul on the MXU, f32 accumulate + bias + ReLU.
    for i in range(3):
        w = wr_ref[i * p:(i + 1) * p, :]                 # static slice -> view
        h = jnp.dot(h, w, preferred_element_type=jnp.float32) + b_ref[i + 1:i + 2, :]
        h = jnp.maximum(h, 0.0).astype(jnp.bfloat16)

    # Fused output head: [mean | log_std | zero pad] in one matmul.
    wh = wr_ref[3 * p:4 * p, :]
    head = jnp.dot(h, wh, preferred_element_type=jnp.float32) + b_ref[4:5, :]

    # Clamp only the log_std lanes via per-lane lo/hi bound rows (no iota).
    head = jnp.minimum(jnp.maximum(head, b_ref[6:7, :]), b_ref[7:8, :])

    # Narrow store: only the 2*A meaningful lanes go back to HBM.
    out_ref[...] = head[:, :out_ref.shape[1]].astype(out_ref.dtype)


@functools.partial(jax.jit, static_argnames=("num_actions",))
def policy_forward(state, w1_packed, wr_packed, b_packed, *, num_actions):
    """state: (B, num_inputs) f32.  Returns (mean, log_std), each (B, A) f32."""
    batch, d_in = state.shape
    p = wr_packed.shape[1]
    out_w = 2 * num_actions

    x = state.astype(jnp.bfloat16)   # halve input DMA bytes; no column pad

    if batch <= SINGLE_STEP_BATCH:
        # Tiny-batch / inference path: single grid step, block = full array
        # dims, zero row padding -> no extra wrapper HBM round trips.
        tile_b, n_steps = batch, 1
    else:
        # >=2 evenly-split, 8-aligned tiles: bounds batch-padding waste,
        # amortizes per-step overhead, and lets the "parallel" axis shard
        # across v7x's two TensorCores (harmless on v5e/v6e).
        n_steps = max(2, _cdiv(batch, TILE_B_MAX))
        tile_b = _round_up(_cdiv(batch, n_steps), 8)
    b_pad = tile_b * n_steps

    if b_pad != batch:
        x = jnp.zeros((b_pad, d_in), jnp.bfloat16).at[:batch].set(x)

    out = pl.pallas_call(
        policy_kernel,
        out_shape=jax.ShapeDtypeStruct((b_pad, out_w), jnp.float32),
        grid=(n_steps,),
        in_specs=[
            pl.BlockSpec((tile_b, d_in), lambda i: (i, 0)),            # state
            pl.BlockSpec((w1_packed.shape[0], p), lambda i: (0, 0)),   # w1 (resident)
            pl.BlockSpec((wr_packed.shape[0], p), lambda i: (0, 0)),   # w2..4 + head
            pl.BlockSpec((8, p), lambda i: (0, 0)),                    # biases + clamps
        ],
        out_specs=pl.BlockSpec((tile_b, out_w), lambda i: (i, 0)),
        compiler_params=pltpu.CompilerParams(
            dimension_semantics=("parallel",)),
    )(x, w1_packed, wr_packed, b_packed)

    mean = out[:batch, :num_actions]
    log_std = out[:batch, num_actions:]
    return mean, log_std


def init_params(key, num_inputs, num_actions, hidden_size, init_w=0.003):
    """Deterministic synthetic init mirroring PyTorch layer shapes.

    PyTorch nn.Linear weight is (out, in); we store the transpose (in, out)
    so the math is x @ W + b.  Hidden layers use a uniform kaiming-like range;
    the two output heads use uniform(-init_w, init_w) as in the module.
    """
    keys = jax.random.split(key, 12)

    def lin(kw, kb, fan_in, fan_out, bound):
        w = jax.random.uniform(kw, (fan_in, fan_out), jnp.float32, -bound, bound)
        b = jax.random.uniform(kb, (1, fan_out), jnp.float32, -bound, bound)
        return w, b

    hidden_bound = 1.0 / jnp.sqrt(jnp.float32(hidden_size))
    in_bound = 1.0 / jnp.sqrt(jnp.float32(num_inputs))

    w1, b1 = lin(keys[0], keys[1], num_inputs, hidden_size, in_bound)
    w2, b2 = lin(keys[2], keys[3], hidden_size, hidden_size, hidden_bound)
    w3, b3 = lin(keys[4], keys[5], hidden_size, hidden_size, hidden_bound)
    w4, b4 = lin(keys[6], keys[7], hidden_size, hidden_size, hidden_bound)
    wm, bm = lin(keys[8], keys[9], hidden_size, num_actions, init_w)
    ws, bs = lin(keys[10], keys[11], hidden_size, num_actions, init_w)

    return dict(w1=w1, b1=b1, w2=w2, b2=b2, w3=w3, b3=b3, w4=w4, b4=b4,
                wm=wm, bm=bm, ws=ws, bs=bs)


def pack_params(params, num_inputs, num_actions, hidden_size):
    """Pack / pad parameters for the kernel.

    Returns:
      w1_packed: (num_inputs, P) bf16  layer-1 weight, zero-padded cols
      wr_packed: (4*P, P)        bf16  [w2; w3; w4; [wm|ws]] zero-padded
      b_packed : (8, P)          f32   rows 0..3=b1..b4, row 4=[bm|bs],
                                       row 5=0, row 6=lo clamp, row 7=hi clamp
    """
    p = _round_up(max(hidden_size, 2 * num_actions, LANES), LANES)

    w1_packed = (jnp.zeros((num_inputs, p), jnp.float32)
                 .at[:, :hidden_size].set(params["w1"]).astype(jnp.bfloat16))

    def pad_w(w):
        out = jnp.zeros((p, p), jnp.float32)
        return out.at[:w.shape[0], :w.shape[1]].set(w)

    w_head = jnp.concatenate([params["wm"], params["ws"]], axis=1)
    wr_packed = jnp.concatenate(
        [pad_w(params["w2"]), pad_w(params["w3"]), pad_w(params["w4"]),
         pad_w(w_head)], axis=0).astype(jnp.bfloat16)

    def pad_b(b):
        out = jnp.zeros((p,), jnp.float32)
        return out.at[:b.shape[1]].set(b[0])

    b_head = jnp.concatenate([params["bm"], params["bs"]], axis=1)

    col = jnp.arange(p)
    is_log_std = (col >= num_actions) & (col < 2 * num_actions)
    lo_row = jnp.where(is_log_std, LOG_STD_MIN, -jnp.inf).astype(jnp.float32)
    hi_row = jnp.where(is_log_std, LOG_STD_MAX, jnp.inf).astype(jnp.float32)

    b_packed = jnp.stack(
        [pad_b(params["b1"]), pad_b(params["b2"]), pad_b(params["b3"]),
         pad_b(params["b4"]), pad_b(b_head), jnp.zeros((p,), jnp.float32),
         lo_row, hi_row], axis=0)
    return w1_packed, wr_packed, b_packed


def reference_forward_f32(state, params):
    """Exact f32 semantics of the PyTorch module."""
    h = jnp.maximum(state @ params["w1"] + params["b1"], 0.0)
    h = jnp.maximum(h @ params["w2"] + params["b2"], 0.0)
    h = jnp.maximum(h @ params["w3"] + params["b3"], 0.0)
    h = jnp.maximum(h @ params["w4"] + params["b4"], 0.0)
    mean = h @ params["wm"] + params["bm"]
    log_std = jnp.clip(h @ params["ws"] + params["bs"], LOG_STD_MIN, LOG_STD_MAX)
    return mean, log_std


def reference_forward_bf16(state, params):
    """Mirror of the kernel math: bf16 operands, f32 accumulation."""
    def dot16(a, w):
        return jnp.dot(a.astype(jnp.bfloat16), w.astype(jnp.bfloat16),
                       preferred_element_type=jnp.float32)

    h = state
    for wk, bk in (("w1", "b1"), ("w2", "b2"), ("w3", "b3"), ("w4", "b4")):
        h = jnp.maximum(dot16(h, params[wk]) + params[bk], 0.0)
    mean = dot16(h, params["wm"]) + params["bm"]
    log_std = jnp.clip(dot16(h, params["ws"]) + params["bs"],
                       LOG_STD_MIN, LOG_STD_MAX)
    return mean, log_std


if __name__ == "__main__":
    # Shapes implied by the module / surrounding script: state dim 43,
    # a small hidden width, a handful of actions, small batch.
    batch = 2
    num_inputs = 43
    num_actions = 4
    hidden_size = 32

    key = jax.random.PRNGKey(0)
    k_state, k_params = jax.random.split(key)

    state = jax.random.normal(k_state, (batch, num_inputs), jnp.float32)
    params = init_params(k_params, num_inputs, num_actions, hidden_size)
    w1_p, wr_p, b_p = pack_params(params, num_inputs, num_actions, hidden_size)

    mean, log_std = policy_forward(state, w1_p, wr_p, b_p,
                                   num_actions=num_actions)
    mean = jax.block_until_ready(mean)
    log_std = jax.block_until_ready(log_std)

    assert mean.shape == (batch, num_actions)
    assert log_std.shape == (batch, num_actions)

    # Strict check vs. a reference using the same bf16-operand / f32-acc math.
    m16, s16 = reference_forward_bf16(state, params)
    assert jnp.allclose(mean, m16, atol=2e-3, rtol=2e-3)
    assert jnp.allclose(log_std, s16, atol=2e-3, rtol=2e-3)

    # Looser check vs. the exact f32 PyTorch semantics (bf16 rounding bound).
    mf, sf = reference_forward_f32(state, params)
    assert jnp.allclose(mean, mf, atol=2e-2, rtol=2e-2)
    assert jnp.allclose(log_std, sf, atol=2e-2, rtol=2e-2)

    # Also exercise the multi-step (tiled, row-padded) path once.
    big_batch = 300
    state_big = jax.random.normal(jax.random.PRNGKey(1),
                                  (big_batch, num_inputs), jnp.float32)
    mb, sb = policy_forward(state_big, w1_p, wr_p, b_p,
                            num_actions=num_actions)
    mb = jax.block_until_ready(mb)
    sb = jax.block_until_ready(sb)
    m16b, s16b = reference_forward_bf16(state_big, params)
    assert mb.shape == (big_batch, num_actions)
    assert jnp.allclose(mb, m16b, atol=2e-3, rtol=2e-3)
    assert jnp.allclose(sb, s16b, atol=2e-3, rtol=2e-3)

    print("KERNEL_OK")
</pallas_src>

<mosaic_0001>
module attributes {stable_mosaic.version = 11 : i64} {
  func.func @policy_kernel(%arg0: i32, %arg1: memref<2x43xbf16, #tpu.memory_space<vmem>>, %arg2: memref<43x128xbf16, #tpu.memory_space<vmem>>, %arg3: memref<512x128xbf16, #tpu.memory_space<vmem>>, %arg4: memref<8x128xf32, #tpu.memory_space<vmem>>, %arg5: memref<2x8xf32, #tpu.memory_space<vmem>>) attributes {dimension_semantics = [#tpu.dimension_semantics<parallel>], iteration_bounds = array<i64: 1>, scalar_prefetch = 0 : i64, scratch_operands = 0 : i64, tpu.core_type = #tpu.core_type<tc>, window_params = [{transform_indices = @transform_0, window_bounds = array<i64: 2, 43>}, {pipeline_mode = #tpu.pipeline_mode<synchronous>, transform_indices = @transform_1, window_bounds = array<i64: 43, 128>}, {pipeline_mode = #tpu.pipeline_mode<synchronous>, transform_indices = @transform_2, window_bounds = array<i64: 512, 128>}, {pipeline_mode = #tpu.pipeline_mode<synchronous>, transform_indices = @transform_3, window_bounds = array<i64: 8, 128>}, {transform_indices = @transform_4, window_bounds = array<i64: 2, 8>}]} {
    %c0 = arith.constant 0 : index
    %c0_0 = arith.constant 0 : index
    %0 = vector.load %arg1[%c0, %c0_0] : memref<2x43xbf16, #tpu.memory_space<vmem>>, vector<2x43xbf16>
    %c0_1 = arith.constant 0 : index
    %c0_2 = arith.constant 0 : index
    %1 = vector.load %arg2[%c0_1, %c0_2] : memref<43x128xbf16, #tpu.memory_space<vmem>>, vector<43x128xbf16>
    %cst = arith.constant dense<0.000000e+00> : vector<2x128xf32>
    %2 = tpu.matmul %0, %1, %cst {dimension_numbers = #tpu.dot_dimension_numbers<[1], [0], [0], [1], [0, 0, 1, 1], [], []>} : vector<2x43xbf16>, vector<43x128xbf16>, vector<2x128xf32> -> vector<2x128xf32>
    %c0_3 = arith.constant 0 : index
    %c0_4 = arith.constant 0 : index
    %3 = vector.load %arg4[%c0_3, %c0_4] : memref<8x128xf32, #tpu.memory_space<vmem>>, vector<1x128xf32>
    %4 = vector.broadcast %3 : vector<1x128xf32> to vector<2x128xf32>
    %5 = arith.addf %2, %4 : vector<2x128xf32>
    %cst_5 = arith.constant 0.000000e+00 : f32
    %6 = vector.broadcast %cst_5 : f32 to vector<2x128xf32>
    %7 = arith.maximumf %5, %6 : vector<2x128xf32>
    %8 = arith.truncf %7 : vector<2x128xf32> to vector<2x128xbf16>
    %c0_6 = arith.constant 0 : index
    %c0_7 = arith.constant 0 : index
    %9 = vector.load %arg3[%c0_6, %c0_7] : memref<512x128xbf16, #tpu.memory_space<vmem>>, vector<128x128xbf16>
    %cst_8 = arith.constant dense<0.000000e+00> : vector<2x128xf32>
    %10 = tpu.matmul %8, %9, %cst_8 {dimension_numbers = #tpu.dot_dimension_numbers<[1], [0], [0], [1], [0, 0, 1, 1], [], []>} : vector<2x128xbf16>, vector<128x128xbf16>, vector<2x128xf32> -> vector<2x128xf32>
    %c1 = arith.constant 1 : index
    %c0_9 = arith.constant 0 : index
    %11 = vector.load %arg4[%c1, %c0_9] : memref<8x128xf32, #tpu.memory_space<vmem>>, vector<1x128xf32>
    %12 = vector.broadcast %11 : vector<1x128xf32> to vector<2x128xf32>
    %13 = arith.addf %10, %12 : vector<2x128xf32>
    %cst_10 = arith.constant 0.000000e+00 : f32
    %14 = vector.broadcast %cst_10 : f32 to vector<2x128xf32>
    %15 = arith.maximumf %13, %14 : vector<2x128xf32>
    %16 = arith.truncf %15 : vector<2x128xf32> to vector<2x128xbf16>
    %c128 = arith.constant 128 : index
    %c0_11 = arith.constant 0 : index
    %17 = vector.load %arg3[%c128, %c0_11] : memref<512x128xbf16, #tpu.memory_space<vmem>>, vector<128x128xbf16>
    %cst_12 = arith.constant dense<0.000000e+00> : vector<2x128xf32>
    %18 = tpu.matmul %16, %17, %cst_12 {dimension_numbers = #tpu.dot_dimension_numbers<[1], [0], [0], [1], [0, 0, 1, 1], [], []>} : vector<2x128xbf16>, vector<128x128xbf16>, vector<2x128xf32> -> vector<2x128xf32>
    %c2 = arith.constant 2 : index
    %c0_13 = arith.constant 0 : index
    %19 = vector.load %arg4[%c2, %c0_13] : memref<8x128xf32, #tpu.memory_space<vmem>>, vector<1x128xf32>
    %20 = vector.broadcast %19 : vector<1x128xf32> to vector<2x128xf32>
    %21 = arith.addf %18, %20 : vector<2x128xf32>
    %cst_14 = arith.constant 0.000000e+00 : f32
    %22 = vector.broadcast %cst_14 : f32 to vector<2x128xf32>
    %23 = arith.maximumf %21, %22 : vector<2x128xf32>
    %24 = arith.truncf %23 : vector<2x128xf32> to vector<2x128xbf16>
    %c256 = arith.constant 256 : index
    %c0_15 = arith.constant 0 : index
    %25 = vector.load %arg3[%c256, %c0_15] : memref<512x128xbf16, #tpu.memory_space<vmem>>, vector<128x128xbf16>
    %cst_16 = arith.constant dense<0.000000e+00> : vector<2x128xf32>
    %26 = tpu.matmul %24, %25, %cst_16 {dimension_numbers = #tpu.dot_dimension_numbers<[1], [0], [0], [1], [0, 0, 1, 1], [], []>} : vector<2x128xbf16>, vector<128x128xbf16>, vector<2x128xf32> -> vector<2x128xf32>
    %c3 = arith.constant 3 : index
    %c0_17 = arith.constant 0 : index
    %27 = vector.load %arg4[%c3, %c0_17] : memref<8x128xf32, #tpu.memory_space<vmem>>, vector<1x128xf32>
    %28 = vector.broadcast %27 : vector<1x128xf32> to vector<2x128xf32>
    %29 = arith.addf %26, %28 : vector<2x128xf32>
    %cst_18 = arith.constant 0.000000e+00 : f32
    %30 = vector.broadcast %cst_18 : f32 to vector<2x128xf32>
    %31 = arith.maximumf %29, %30 : vector<2x128xf32>
    %32 = arith.truncf %31 : vector<2x128xf32> to vector<2x128xbf16>
    %c384 = arith.constant 384 : index
    %c0_19 = arith.constant 0 : index
    %33 = vector.load %arg3[%c384, %c0_19] : memref<512x128xbf16, #tpu.memory_space<vmem>>, vector<128x128xbf16>
    %cst_20 = arith.constant dense<0.000000e+00> : vector<2x128xf32>
    %34 = tpu.matmul %32, %33, %cst_20 {dimension_numbers = #tpu.dot_dimension_numbers<[1], [0], [0], [1], [0, 0, 1, 1], [], []>} : vector<2x128xbf16>, vector<128x128xbf16>, vector<2x128xf32> -> vector<2x128xf32>
    %c4 = arith.constant 4 : index
    %c0_21 = arith.constant 0 : index
    %35 = vector.load %arg4[%c4, %c0_21] : memref<8x128xf32, #tpu.memory_space<vmem>>, vector<1x128xf32>
    %36 = vector.broadcast %35 : vector<1x128xf32> to vector<2x128xf32>
    %37 = arith.addf %34, %36 : vector<2x128xf32>
    %c6 = arith.constant 6 : index
    %c0_22 = arith.constant 0 : index
    %38 = vector.load %arg4[%c6, %c0_22] : memref<8x128xf32, #tpu.memory_space<vmem>>, vector<1x128xf32>
    %39 = vector.broadcast %38 : vector<1x128xf32> to vector<2x128xf32>
    %40 = arith.maximumf %37, %39 : vector<2x128xf32>
    %c7 = arith.constant 7 : index
    %c0_23 = arith.constant 0 : index
    %41 = vector.load %arg4[%c7, %c0_23] : memref<8x128xf32, #tpu.memory_space<vmem>>, vector<1x128xf32>
    %42 = vector.broadcast %41 : vector<1x128xf32> to vector<2x128xf32>
    %43 = arith.minimumf %40, %42 : vector<2x128xf32>
    %44 = vector.extract_strided_slice %43 {offsets = [0, 0], sizes = [2, 8], strides = [1, 1]} : vector<2x128xf32> to vector<2x8xf32>
    %c0_24 = arith.constant 0 : index
    %c0_25 = arith.constant 0 : index
    %45 = vector.load %arg5[%c0_24, %c0_25] : memref<2x8xf32, #tpu.memory_space<vmem>>, vector<2x8xf32>
    tpu.vector_store %arg5[%c0_24, %c0_25], %44 {strides = array<i32>} : memref<2x8xf32, #tpu.memory_space<vmem>>, vector<2x8xf32>,
    return
  }
  func.func @transform_0(%arg0: i32) -> (i32, i32) {
    %c0_i32 = arith.constant 0 : i32
    %c0_i32_0 = arith.constant 0 : i32
    return %arg0, %c0_i32 : i32, i32
  }
  func.func @transform_1(%arg0: i32) -> (i32, i32) {
    %c0_i32 = arith.constant 0 : i32
    %c0_i32_0 = arith.constant 0 : i32
    %c0_i32_1 = arith.constant 0 : i32
    return %c0_i32, %c0_i32_0 : i32, i32
  }
  func.func @transform_2(%arg0: i32) -> (i32, i32) {
    %c0_i32 = arith.constant 0 : i32
    %c0_i32_0 = arith.constant 0 : i32
    %c0_i32_1 = arith.constant 0 : i32
    return %c0_i32, %c0_i32_0 : i32, i32
  }
  func.func @transform_3(%arg0: i32) -> (i32, i32) {
    %c0_i32 = arith.constant 0 : i32
    %c0_i32_0 = arith.constant 0 : i32
    %c0_i32_1 = arith.constant 0 : i32
    return %c0_i32, %c0_i32_0 : i32, i32
  }
  func.func @transform_4(%arg0: i32) -> (i32, i32) {
    %c0_i32 = arith.constant 0 : i32
    %c0_i32_0 = arith.constant 0 : i32
    return %arg0, %c0_i32 : i32, i32
  }
}

</mosaic_0001>

<llo_original>
// kernel: policy_forward.1
$region0: #{policy_forward.1}
  #allocation0 [shape = 'u32[]', space=smem, size = 0x4, offset = 0x4, fixed_abs, tag = 'smem constant byte address 0x4 - core index']
  #allocation1 [shape = 'u32[144,128]{1,0:T(1,128)}', space=vmem, size = 0x12000, scoped, tag = 'internal scratch']
  %s0 = inlined_call_operand.vmem [shape: bf16[2,43], index: 0, kind: input, shape index: {}]
  %s1 = inlined_call_operand.hbm [shape: bf16[43,128], index: 1, kind: input, shape index: {}]
  %s2 = inlined_call_operand.hbm [shape: bf16[512,128], index: 2, kind: input, shape index: {}]
  %s3 = inlined_call_operand.vmem [shape: f32[8,128], index: 3, kind: input, shape index: {}]
  %s4 = inlined_call_operand.vmem [shape: f32[2,8], index: 4, kind: output, shape index: {}]
  %s5 = sld [smem:[#allocation0]]
  $region34: #{policy_forward.1} parent=0
    _
  %s7 = ssub.s32 1, %s5
  %s8 = scalar_select 0, %s7, %s5
  $region1: #{policy_forward.1} parent=0
    #allocation2 [shape = 'u8[12288]{0}', space=vmem, size = 0x3000, scoped, tag = 'input window, operand 1, single buffered']
    #allocation3 [shape = 's32[1]{0}', space=sflag, size = 0x4, scoped, tag = 'scoped memory for policy_forward.1']
    #allocation4 [shape = 'u8[131072]{0}', space=vmem, size = 0x20000, scoped, tag = 'input window, operand 2, single buffered']
    #allocation5 [shape = 's32[1]{0}', space=sflag, size = 0x4, scoped, tag = 'scoped memory for policy_forward.1']
    %9 = vsyncpa [#allocation3], 0
    %10 = vsyncpa [#allocation5], 0
    // Predicated region
    $region2: #{policy_forward.1} parent=1 // pred_check
      _
    $region3: #{policy_forward.1} parent=1 // pred_check_branch
      %12 = sbr.rel (0) target = $region5
    $region4: #{policy_forward.1} parent=1 // pred_region
      _
    $region5: #{policy_forward.1} parent=1 // pred_fallthru
      _
    // Predicated region
    $region6: #{policy_forward.1} parent=1 // pred_check
      _
    $region7: #{policy_forward.1} parent=1 // pred_check_branch
      %14 = sbr.rel (0) target = $region9
    $region8: #{policy_forward.1} parent=1 // pred_region
      %s16 = ssub.s32 384, 384
      %17 = vsyncadd [#allocation3], %s16
      %s18 = sshll.u32 [#allocation2], 4
      %s19 = int_to_ptr.vmem [resolvable:$true] %s18
      %24 = dma.hbm_to_vmem [thread:$0]  %s1, 384, %s19, [#allocation3], 64, 64, 4
    $region9: #{policy_forward.1} parent=1 // pred_fallthru
      _
    // Predicated region
    $region10: #{policy_forward.1} parent=1 // pred_check
      _
    $region11: #{policy_forward.1} parent=1 // pred_check_branch
      %26 = sbr.rel (0) target = $region13
    $region12: #{policy_forward.1} parent=1 // pred_region
      %s28 = ssub.s32 4096, 4096
      %29 = vsyncadd [#allocation5], %s28
      %s30 = sshll.u32 [#allocation4], 4
      %s31 = int_to_ptr.vmem [resolvable:$true] %s30
      %36 = dma.hbm_to_vmem [thread:$0]  %s2, 4096, %s31, [#allocation5], 64, 64, 4
    $region13: #{policy_forward.1} parent=1 // pred_fallthru
      _
    // Predicated region
    $region14: #{policy_forward.1} parent=1 // pred_check
      _
    $region15: #{policy_forward.1} parent=1 // pred_check_branch
      %38 = sbr.rel (0) target = $region17
    $region16: #{policy_forward.1} parent=1 // pred_region
      _
    $region17: #{policy_forward.1} parent=1 // pred_fallthru
      _
    // Predicated region
    $region18: #{policy_forward.1} parent=1 // pred_check
      _
    $region19: #{policy_forward.1} parent=1 // pred_check_branch
      %40 = sbr.rel (0) target = $region21
    $region20: #{policy_forward.1} parent=1 // pred_region
      %41 = dma.done [#allocation3], 384
    $region21: #{policy_forward.1} parent=1 // pred_fallthru
      _
    // Predicated region
    $region22: #{policy_forward.1} parent=1 // pred_check
      _
    $region23: #{policy_forward.1} parent=1 // pred_check_branch
      %43 = sbr.rel (0) target = $region25
    $region24: #{policy_forward.1} parent=1 // pred_region
      %44 = dma.done [#allocation5], 4096
    $region25: #{policy_forward.1} parent=1 // pred_fallthru
      _
    %v46 = vld [vmem:[%s0] sm:$0x1]
    %v47 = vld [vmem:[#allocation2] sm:$0xf]
    %v48 = vld [vmem:[#allocation2 + $0x4] sm:$0xf]
    %v49 = vld [vmem:[#allocation2 + $0x8] sm:$0xf]
    %v50 = vld [vmem:[#allocation2 + $0xc] sm:$0xf]
    %v51 = vld [vmem:[#allocation2 + $0x10] sm:$0xf]
    %v52 = vld [vmem:[#allocation2 + $0x14] sm:$0x3]
    %v53 = vld [vmem:[%s3] sm:$0x1]
    %v54 = vlaneseq
    %v55 = vshrl.u32 %v54, 7
    %v56 = vsub.s32 0, %v55
    %v57 = vrot.slane %v53, %v56
    %v64 = vunpack.c.l.b16 %v47
    %v65 = vunpack.c.l.b16 %v48
    %v66 = vunpack.c.l.b16 %v49
    %v67 = vunpack.c.l.b16 %v50
    %v68 = vunpack.c.l.b16 %v51
    %v69 = vunpack.c.l.b16 %v52
    %v70 = vpack.c.b16 %v65, %v64
    %v71 = vpack.c.b16 %v67, %v66
    %v72 = vpack.c.b16 %v69, %v68
    %vm75 = vcmask 351232
    %v77 = vsel %vm75, %v46, 0
    %vm79 = vcmask 1044480
    %vm80 = vcmask 1045504
    %v81 = vsel %vm79, 4294967295, 65535
    %v82 = vsel %vm80, %v81, 0
    %v84 = vand.u32 %v72, %v82
    %86 = vmatprep.subr.bf16.mxu0 0
    %87 = vmatpush1.bf16.msra.mxu0 %v70
    %88 = vmatprep.subr.bf16.mxu0 0
    %89 = vmatpush1.bf16.msra.mxu0 %v71
    %90 = vmatprep.subr.bf16.mxu0 0
    %91 = vmatpush1.bf16.msra.mxu0 %v84
    %92 = vmatprep.subr.bf16.mxu0 0
    %93 = vmatpush1.bf16.msra.mxu0 0
    %94 = vmatprep.subr.bf16.mxu0 0
    %95 = vmatpush1.bf16.msra.mxu0 0
    %96 = vmatprep.subr.bf16.mxu0 0
    %97 = vmatpush1.bf16.msra.mxu0 0
    %98 = vmatprep.subr.bf16.mxu0 0
    %99 = vmatpush1.bf16.msra.mxu0 0
    %100 = vmatprep.subr.bf16.mxu0 0
    %101 = vmatpush1.bf16.msra.mxu0 0
    %102 = vmatprep.subr.bf16.mxu0 0
    %103 = vmatpush1.bf16.msra.mxu0 0
    %104 = vmatprep.subr.bf16.mxu0 0
    %105 = vmatpush1.bf16.msra.mxu0 0
    %106 = vmatprep.subr.bf16.mxu0 0
    %107 = vmatpush1.bf16.msra.mxu0 0
    %108 = vmatprep.subr.bf16.mxu0 0
    %109 = vmatpush1.bf16.msra.mxu0 0
    %110 = vmatprep.subr.bf16.mxu0 0
    %111 = vmatpush1.bf16.msra.mxu0 0
    %112 = vmatprep.subr.bf16.mxu0 0
    %113 = vmatpush1.bf16.msra.mxu0 0
    %114 = vmatprep.subr.bf16.mxu0 0
    %115 = vmatpush1.bf16.msra.mxu0 0
    %116 = vmatprep.subr.bf16.mxu0 0
    %117 = vmatpush1.bf16.msra.mxu0 0
    %118 = vmatprep.mubr.bf16.mxu0 0
    %119 = vmatmul.mubr.bf16.gmra.mrb[0].mxu0 %v77
    %v120 = vpop.f32.mrb[0].mxu0
    %v121 = vadd.f32 %v57, %v120
    %v122 = vpop.f32.mrb[0].mxu0
    %v123 = vpop.f32.mrb[0].mxu0
    %v124 = vpop.f32.mrb[0].mxu0
    %125 = vdwg.mxu0
    %v126 = vmax.f32 %v121, 0.0
    %v127 = vpack.c.bf16 %v126, %v126
    %v128 = vld [vmem:[#allocation4] sm:$0xf]
    %v129 = vld [vmem:[#allocation4 + $0x4] sm:$0xf]
    %v130 = vld [vmem:[#allocation4 + $0x8] sm:$0xf]
    %v131 = vld [vmem:[#allocation4 + $0xc] sm:$0xf]
    %v132 = vld [vmem:[#allocation4 + $0x10] sm:$0xf]
    %v133 = vld [vmem:[#allocation4 + $0x14] sm:$0xf]
    %v134 = vld [vmem:[#allocation4 + $0x18] sm:$0xf]
    %v135 = vld [vmem:[#allocation4 + $0x1c] sm:$0xf]
    %v136 = vld [vmem:[#allocation4 + $0x20] sm:$0xf]
    %v137 = vld [vmem:[#allocation4 + $0x24] sm:$0xf]
    %v138 = vld [vmem:[#allocation4 + $0x28] sm:$0xf]
    %v139 = vld [vmem:[#allocation4 + $0x2c] sm:$0xf]
    %v140 = vld [vmem:[#allocation4 + $0x30] sm:$0xf]
    %v141 = vld [vmem:[#allocation4 + $0x34] sm:$0xf]
    %v142 = vld [vmem:[#allocation4 + $0x38] sm:$0xf]
    %v143 = vld [vmem:[#allocation4 + $0x3c] sm:$0xf]
    %v144 = vld [vmem:[%s3 + $0x1] sm:$0x1]
    %v145 = vlaneseq
    %v146 = vshrl.u32 %v145, 7
    %v147 = vsub.s32 0, %v146
    %v148 = vrot.slane %v144, %v147
    %v165 = vunpack.c.l.b16 %v128
    %v166 = vunpack.c.l.b16 %v129
    %v167 = vunpack.c.l.b16 %v130
    %v168 = vunpack.c.l.b16 %v131
    %v169 = vunpack.c.l.b16 %v132
    %v170 = vunpack.c.l.b16 %v133
    %v171 = vunpack.c.l.b16 %v134
    %v172 = vunpack.c.l.b16 %v135
    %v173 = vunpack.c.l.b16 %v136
    %v174 = vunpack.c.l.b16 %v137
    %v175 = vunpack.c.l.b16 %v138
    %v176 = vunpack.c.l.b16 %v139
    %v177 = vunpack.c.l.b16 %v140
    %v178 = vunpack.c.l.b16 %v141
    %v179 = vunpack.c.l.b16 %v142
    %v180 = vunpack.c.l.b16 %v143
    %v181 = vpack.c.b16 %v166, %v165
    %v182 = vpack.c.b16 %v168, %v167
    %v183 = vpack.c.b16 %v170, %v169
    %v184 = vpack.c.b16 %v172, %v171
    %v185 = vpack.c.b16 %v174, %v173
    %v186 = vpack.c.b16 %v176, %v175
    %v187 = vpack.c.b16 %v178, %v177
    %v188 = vpack.c.b16 %v180, %v179
    %197 = vmatprep.subr.bf16.mxu0 0
    %198 = vmatpush1.bf16.msra.mxu0 %v181
    %199 = vmatprep.subr.bf16.mxu0 0
    %200 = vmatpush1.bf16.msra.mxu0 %v182
    %201 = vmatprep.subr.bf16.mxu0 0
    %202 = vmatpush1.bf16.msra.mxu0 %v183
    %203 = vmatprep.subr.bf16.mxu0 0
    %204 = vmatpush1.bf16.msra.mxu0 %v184
    %205 = vmatprep.subr.bf16.mxu0 0
    %206 = vmatpush1.bf16.msra.mxu0 %v185
    %207 = vmatprep.subr.bf16.mxu0 0
    %208 = vmatpush1.bf16.msra.mxu0 %v186
    %209 = vmatprep.subr.bf16.mxu0 0
    %210 = vmatpush1.bf16.msra.mxu0 %v187
    %211 = vmatprep.subr.bf16.mxu0 0
    %212 = vmatpush1.bf16.msra.mxu0 %v188
    %213 = vmatprep.subr.bf16.mxu0 0
    %214 = vmatpush1.bf16.msra.mxu0 0
    %215 = vmatprep.subr.bf16.mxu0 0
    %216 = vmatpush1.bf16.msra.mxu0 0
    %217 = vmatprep.subr.bf16.mxu0 0
    %218 = vmatpush1.bf16.msra.mxu0 0
    %219 = vmatprep.subr.bf16.mxu0 0
    %220 = vmatpush1.bf16.msra.mxu0 0
    %221 = vmatprep.subr.bf16.mxu0 0
    %222 = vmatpush1.bf16.msra.mxu0 0
    %223 = vmatprep.subr.bf16.mxu0 0
    %224 = vmatpush1.bf16.msra.mxu0 0
    %225 = vmatprep.subr.bf16.mxu0 0
    %226 = vmatpush1.bf16.msra.mxu0 0
    %227 = vmatprep.subr.bf16.mxu0 0
    %228 = vmatpush1.bf16.msra.mxu0 0
    %229 = vmatprep.mubr.bf16.mxu0 0
    %230 = vmatmul.mubr.bf16.gmra.mrb[0].mxu0 %v127
    %v231 = vpop.f32.mrb[0].mxu0
    %v232 = vadd.f32 %v148, %v231
    %v233 = vpop.f32.mrb[0].mxu0
    %v234 = vpop.f32.mrb[0].mxu0
    %v235 = vpop.f32.mrb[0].mxu0
    %236 = vdwg.mxu0
    %v237 = vmax.f32 %v232, 0.0
    %v238 = vpack.c.bf16 %v237, %v237
    %v239 = vld [vmem:[#allocation4 + $0x40] sm:$0xf]
    %v240 = vld [vmem:[#allocation4 + $0x44] sm:$0xf]
    %v241 = vld [vmem:[#allocation4 + $0x48] sm:$0xf]
    %v242 = vld [vmem:[#allocation4 + $0x4c] sm:$0xf]
    %v243 = vld [vmem:[#allocation4 + $0x50] sm:$0xf]
    %v244 = vld [vmem:[#allocation4 + $0x54] sm:$0xf]
    %v245 = vld [vmem:[#allocation4 + $0x58] sm:$0xf]
    %v246 = vld [vmem:[#allocation4 + $0x5c] sm:$0xf]
    %v247 = vld [vmem:[#allocation4 + $0x60] sm:$0xf]
    %v248 = vld [vmem:[#allocation4 + $0x64] sm:$0xf]
    %v249 = vld [vmem:[#allocation4 + $0x68] sm:$0xf]
    %v250 = vld [vmem:[#allocation4 + $0x6c] sm:$0xf]
    %v251 = vld [vmem:[#allocation4 + $0x70] sm:$0xf]
    %v252 = vld [vmem:[#allocation4 + $0x74] sm:$0xf]
    %v253 = vld [vmem:[#allocation4 + $0x78] sm:$0xf]
    %v254 = vld [vmem:[#allocation4 + $0x7c] sm:$0xf]
    %v255 = vld [vmem:[%s3 + $0x2] sm:$0x1]
    %v256 = vlaneseq
    %v257 = vshrl.u32 %v256, 7
    %v258 = vsub.s32 0, %v257
    %v259 = vrot.slane %v255, %v258
    %v276 = vunpack.c.l.b16 %v239
    %v277 = vunpack.c.l.b16 %v240
    %v278 = vunpack.c.l.b16 %v241
    %v279 = vunpack.c.l.b16 %v242
    %v280 = vunpack.c.l.b16 %v243
    %v281 = vunpack.c.l.b16 %v244
    %v282 = vunpack.c.l.b16 %v245
    %v283 = vunpack.c.l.b16 %v246
    %v284 = vunpack.c.l.b16 %v247
    %v285 = vunpack.c.l.b16 %v248
    %v286 = vunpack.c.l.b16 %v249
    %v287 = vunpack.c.l.b16 %v250
    %v288 = vunpack.c.l.b16 %v251
    %v289 = vunpack.c.l.b16 %v252
    %v290 = vunpack.c.l.b16 %v253
    %v291 = vunpack.c.l.b16 %v254
    %v292 = vpack.c.b16 %v277, %v276
    %v293 = vpack.c.b16 %v279, %v278
    %v294 = vpack.c.b16 %v281, %v280
    %v295 = vpack.c.b16 %v283, %v282
    %v296 = vpack.c.b16 %v285, %v284
    %v297 = vpack.c.b16 %v287, %v286
    %v298 = vpack.c.b16 %v289, %v288
    %v299 = vpack.c.b16 %v291, %v290
    %308 = vmatprep.subr.bf16.mxu0 0
    %309 = vmatpush1.bf16.msra.mxu0 %v292
    %310 = vmatprep.subr.bf16.mxu0 0
    %311 = vmatpush1.bf16.msra.mxu0 %v293
    %312 = vmatprep.subr.bf16.mxu0 0
    %313 = vmatpush1.bf16.msra.mxu0 %v294
    %314 = vmatprep.subr.bf16.mxu0 0
    %315 = vmatpush1.bf16.msra.mxu0 %v295
    %316 = vmatprep.subr.bf16.mxu0 0
    %317 = vmatpush1.bf16.msra.mxu0 %v296
    %318 = vmatprep.subr.bf16.mxu0 0
    %319 = vmatpush1.bf16.msra.mxu0 %v297
    %320 = vmatprep.subr.bf16.mxu0 0
    %321 = vmatpush1.bf16.msra.mxu0 %v298
    %322 = vmatprep.subr.bf16.mxu0 0
    %323 = vmatpush1.bf16.msra.mxu0 %v299
    %324 = vmatprep.subr.bf16.mxu0 0
    %325 = vmatpush1.bf16.msra.mxu0 0
    %326 = vmatprep.subr.bf16.mxu0 0
    %327 = vmatpush1.bf16.msra.mxu0 0
    %328 = vmatprep.subr.bf16.mxu0 0
    %329 = vmatpush1.bf16.msra.mxu0 0
    %330 = vmatprep.subr.bf16.mxu0 0
    %331 = vmatpush1.bf16.msra.mxu0 0
    %332 = vmatprep.subr.bf16.mxu0 0
    %333 = vmatpush1.bf16.msra.mxu0 0
    %334 = vmatprep.subr.bf16.mxu0 0
    %335 = vmatpush1.bf16.msra.mxu0 0
    %336 = vmatprep.subr.bf16.mxu0 0
    %337 = vmatpush1.bf16.msra.mxu0 0
    %338 = vmatprep.subr.bf16.mxu0 0
    %339 = vmatpush1.bf16.msra.mxu0 0
    %340 = vmatprep.mubr.bf16.mxu0 0
    %341 = vmatmul.mubr.bf16.gmra.mrb[0].mxu0 %v238
    %v342 = vpop.f32.mrb[0].mxu0
    %v343 = vadd.f32 %v259, %v342
    %v344 = vpop.f32.mrb[0].mxu0
    %v345 = vpop.f32.mrb[0].mxu0
    %v346 = vpop.f32.mrb[0].mxu0
    %347 = vdwg.mxu0
    %v348 = vmax.f32 %v343, 0.0
    %v349 = vpack.c.bf16 %v348, %v348
    %v350 = vld [vmem:[#allocation4 + $0x80] sm:$0xf]
    %v351 = vld [vmem:[#allocation4 + $0x84] sm:$0xf]
    %v352 = vld [vmem:[#allocation4 + $0x88] sm:$0xf]
    %v353 = vld [vmem:[#allocation4 + $0x8c] sm:$0xf]
    %v354 = vld [vmem:[#allocation4 + $0x90] sm:$0xf]
    %v355 = vld [vmem:[#allocation4 + $0x94] sm:$0xf]
    %v356 = vld [vmem:[#allocation4 + $0x98] sm:$0xf]
    %v357 = vld [vmem:[#allocation4 + $0x9c] sm:$0xf]
    %v358 = vld [vmem:[#allocation4 + $0xa0] sm:$0xf]
    %v359 = vld [vmem:[#allocation4 + $0xa4] sm:$0xf]
    %v360 = vld [vmem:[#allocation4 + $0xa8] sm:$0xf]
    %v361 = vld [vmem:[#allocation4 + $0xac] sm:$0xf]
    %v362 = vld [vmem:[#allocation4 + $0xb0] sm:$0xf]
    %v363 = vld [vmem:[#allocation4 + $0xb4] sm:$0xf]
    %v364 = vld [vmem:[#allocation4 + $0xb8] sm:$0xf]
    %v365 = vld [vmem:[#allocation4 + $0xbc] sm:$0xf]
    %v366 = vld [vmem:[%s3 + $0x3] sm:$0x1]
    %v367 = vlaneseq
    %v368 = vshrl.u32 %v367, 7
    %v369 = vsub.s32 0, %v368
    %v370 = vrot.slane %v366, %v369
    %v387 = vunpack.c.l.b16 %v350
    %v388 = vunpack.c.l.b16 %v351
    %v389 = vunpack.c.l.b16 %v352
    %v390 = vunpack.c.l.b16 %v353
    %v391 = vunpack.c.l.b16 %v354
    %v392 = vunpack.c.l.b16 %v355
    %v393 = vunpack.c.l.b16 %v356
    %v394 = vunpack.c.l.b16 %v357
    %v395 = vunpack.c.l.b16 %v358
    %v396 = vunpack.c.l.b16 %v359
    %v397 = vunpack.c.l.b16 %v360
    %v398 = vunpack.c.l.b16 %v361
    %v399 = vunpack.c.l.b16 %v362
    %v400 = vunpack.c.l.b16 %v363
    %v401 = vunpack.c.l.b16 %v364
    %v402 = vunpack.c.l.b16 %v365
    %v403 = vpack.c.b16 %v388, %v387
    %v404 = vpack.c.b16 %v390, %v389
    %v405 = vpack.c.b16 %v392, %v391
    %v406 = vpack.c.b16 %v394, %v393
    %v407 = vpack.c.b16 %v396, %v395
    %v408 = vpack.c.b16 %v398, %v397
    %v409 = vpack.c.b16 %v400, %v399
    %v410 = vpack.c.b16 %v402, %v401
    %419 = vmatprep.subr.bf16.mxu0 0
    %420 = vmatpush1.bf16.msra.mxu0 %v403
    %421 = vmatprep.subr.bf16.mxu0 0
    %422 = vmatpush1.bf16.msra.mxu0 %v404
    %423 = vmatprep.subr.bf16.mxu0 0
    %424 = vmatpush1.bf16.msra.mxu0 %v405
    %425 = vmatprep.subr.bf16.mxu0 0
    %426 = vmatpush1.bf16.msra.mxu0 %v406
    %427 = vmatprep.subr.bf16.mxu0 0
    %428 = vmatpush1.bf16.msra.mxu0 %v407
    %429 = vmatprep.subr.bf16.mxu0 0
    %430 = vmatpush1.bf16.msra.mxu0 %v408
    %431 = vmatprep.subr.bf16.mxu0 0
    %432 = vmatpush1.bf16.msra.mxu0 %v409
    %433 = vmatprep.subr.bf16.mxu0 0
    %434 = vmatpush1.bf16.msra.mxu0 %v410
    %435 = vmatprep.subr.bf16.mxu0 0
    %436 = vmatpush1.bf16.msra.mxu0 0
    %437 = vmatprep.subr.bf16.mxu0 0
    %438 = vmatpush1.bf16.msra.mxu0 0
    %439 = vmatprep.subr.bf16.mxu0 0
    %440 = vmatpush1.bf16.msra.mxu0 0
    %441 = vmatprep.subr.bf16.mxu0 0
    %442 = vmatpush1.bf16.msra.mxu0 0
    %443 = vmatprep.subr.bf16.mxu0 0
    %444 = vmatpush1.bf16.msra.mxu0 0
    %445 = vmatprep.subr.bf16.mxu0 0
    %446 = vmatpush1.bf16.msra.mxu0 0
    %447 = vmatprep.subr.bf16.mxu0 0
    %448 = vmatpush1.bf16.msra.mxu0 0
    %449 = vmatprep.subr.bf16.mxu0 0
    %450 = vmatpush1.bf16.msra.mxu0 0
    %451 = vmatprep.mubr.bf16.mxu0 0
    %452 = vmatmul.mubr.bf16.gmra.mrb[0].mxu0 %v349
    %v453 = vpop.f32.mrb[0].mxu0
    %v454 = vadd.f32 %v370, %v453
    %v455 = vpop.f32.mrb[0].mxu0
    %v456 = vpop.f32.mrb[0].mxu0
    %v457 = vpop.f32.mrb[0].mxu0
    %458 = vdwg.mxu0
    %v459 = vmax.f32 %v454, 0.0
    %v460 = vpack.c.bf16 %v459, %v459
    %v461 = vld [vmem:[#allocation4 + $0xc0] sm:$0xf]
    %v462 = vld [vmem:[#allocation4 + $0xc4] sm:$0xf]
    %v463 = vld [vmem:[#allocation4 + $0xc8] sm:$0xf]
    %v464 = vld [vmem:[#allocation4 + $0xcc] sm:$0xf]
    %v465 = vld [vmem:[#allocation4 + $0xd0] sm:$0xf]
    %v466 = vld [vmem:[#allocation4 + $0xd4] sm:$0xf]
    %v467 = vld [vmem:[#allocation4 + $0xd8] sm:$0xf]
    %v468 = vld [vmem:[#allocation4 + $0xdc] sm:$0xf]
    %v469 = vld [vmem:[#allocation4 + $0xe0] sm:$0xf]
    %v470 = vld [vmem:[#allocation4 + $0xe4] sm:$0xf]
    %v471 = vld [vmem:[#allocation4 + $0xe8] sm:$0xf]
    %v472 = vld [vmem:[#allocation4 + $0xec] sm:$0xf]
    %v473 = vld [vmem:[#allocation4 + $0xf0] sm:$0xf]
    %v474 = vld [vmem:[#allocation4 + $0xf4] sm:$0xf]
    %v475 = vld [vmem:[#allocation4 + $0xf8] sm:$0xf]
    %v476 = vld [vmem:[#allocation4 + $0xfc] sm:$0xf]
    %v477 = vld [vmem:[%s3 + $0x4] sm:$0x1]
    %v478 = vlaneseq
    %v479 = vshrl.u32 %v478, 7
    %v480 = vsub.s32 0, %v479
    %v481 = vrot.slane %v477, %v480
    %v498 = vunpack.c.l.b16 %v461
    %v499 = vunpack.c.l.b16 %v462
    %v500 = vunpack.c.l.b16 %v463
    %v501 = vunpack.c.l.b16 %v464
    %v502 = vunpack.c.l.b16 %v465
    %v503 = vunpack.c.l.b16 %v466
    %v504 = vunpack.c.l.b16 %v467
    %v505 = vunpack.c.l.b16 %v468
    %v506 = vunpack.c.l.b16 %v469
    %v507 = vunpack.c.l.b16 %v470
    %v508 = vunpack.c.l.b16 %v471
    %v509 = vunpack.c.l.b16 %v472
    %v510 = vunpack.c.l.b16 %v473
    %v511 = vunpack.c.l.b16 %v474
    %v512 = vunpack.c.l.b16 %v475
    %v513 = vunpack.c.l.b16 %v476
    %v514 = vpack.c.b16 %v499, %v498
    %v515 = vpack.c.b16 %v501, %v500
    %v516 = vpack.c.b16 %v503, %v502
    %v517 = vpack.c.b16 %v505, %v504
    %v518 = vpack.c.b16 %v507, %v506
    %v519 = vpack.c.b16 %v509, %v508
    %v520 = vpack.c.b16 %v511, %v510
    %v521 = vpack.c.b16 %v513, %v512
    %530 = vmatprep.subr.bf16.mxu0 0
    %531 = vmatpush1.bf16.msra.mxu0 %v514
    %532 = vmatprep.subr.bf16.mxu0 0
    %533 = vmatpush1.bf16.msra.mxu0 %v515
    %534 = vmatprep.subr.bf16.mxu0 0
    %535 = vmatpush1.bf16.msra.mxu0 %v516
    %536 = vmatprep.subr.bf16.mxu0 0
    %537 = vmatpush1.bf16.msra.mxu0 %v517
    %538 = vmatprep.subr.bf16.mxu0 0
    %539 = vmatpush1.bf16.msra.mxu0 %v518
    %540 = vmatprep.subr.bf16.mxu0 0
    %541 = vmatpush1.bf16.msra.mxu0 %v519
    %542 = vmatprep.subr.bf16.mxu0 0
    %543 = vmatpush1.bf16.msra.mxu0 %v520
    %544 = vmatprep.subr.bf16.mxu0 0
    %545 = vmatpush1.bf16.msra.mxu0 %v521
    %546 = vmatprep.subr.bf16.mxu0 0
    %547 = vmatpush1.bf16.msra.mxu0 0
    %548 = vmatprep.subr.bf16.mxu0 0
    %549 = vmatpush1.bf16.msra.mxu0 0
    %550 = vmatprep.subr.bf16.mxu0 0
    %551 = vmatpush1.bf16.msra.mxu0 0
    %552 = vmatprep.subr.bf16.mxu0 0
    %553 = vmatpush1.bf16.msra.mxu0 0
    %554 = vmatprep.subr.bf16.mxu0 0
    %555 = vmatpush1.bf16.msra.mxu0 0
    %556 = vmatprep.subr.bf16.mxu0 0
    %557 = vmatpush1.bf16.msra.mxu0 0
    %558 = vmatprep.subr.bf16.mxu0 0
    %559 = vmatpush1.bf16.msra.mxu0 0
    %560 = vmatprep.subr.bf16.mxu0 0
    %561 = vmatpush1.bf16.msra.mxu0 0
    %562 = vmatprep.mubr.bf16.mxu0 0
    %563 = vmatmul.mubr.bf16.gmra.mrb[0].mxu0 %v460
    %v564 = vpop.f32.mrb[0].mxu0
    %v565 = vadd.f32 %v481, %v564
    %v566 = vpop.f32.mrb[0].mxu0
    %v567 = vpop.f32.mrb[0].mxu0
    %v568 = vpop.f32.mrb[0].mxu0
    %569 = vdwg.mxu0
    %v570 = vld [vmem:[%s3 + $0x6] sm:$0x1]
    %v571 = vlaneseq
    %v572 = vshrl.u32 %v571, 7
    %v573 = vsub.s32 0, %v572
    %v574 = vrot.slane %v570, %v573
    %v575 = vmax.f32 %v565, %v574
    %v576 = vld [vmem:[%s3 + $0x7] sm:$0x1]
    %v577 = vlaneseq
    %v578 = vshrl.u32 %v577, 7
    %v579 = vsub.s32 0, %v578
    %v580 = vrot.slane %v576, %v579
    %v581 = vmin.f32 %v575, %v580
    %vm582 = vcmask 58368
    %583 = vst.msk [vmem:[%s4] sm:$0x3] %vm582, %v581
    // Predicated region
    $region26: #{policy_forward.1} parent=1 // pred_check
      _
    $region27: #{policy_forward.1} parent=1 // pred_check_branch
      %585 = sbr.rel (0) target = $region29
    $region28: #{policy_forward.1} parent=1 // pred_region
      _
    $region29: #{policy_forward.1} parent=1 // pred_fallthru
      _
    // Predicated region
    $region30: #{policy_forward.1} parent=1 // pred_check
      _
    $region31: #{policy_forward.1} parent=1 // pred_check_branch
      %587 = sbr.rel (0) target = $region33
    $region32: #{policy_forward.1} parent=1 // pred_region
      _
    $region33: #{policy_forward.1} parent=1 // pred_fallthru
      _
    %588 = vsyncpa [#allocation3], 1
    %589 = vsyncpa [#allocation5], 1

</llo_original>
